<compile_context>
chip_gen: v5e
topology: v5e:2x2
jax: 0.10.0
libtpu: 0.0.40
codegen_flags: <defaults>
</compile_context>

<pallas_src>
import jax
import jax.numpy as jnp
from jax.experimental import pallas as pl
from jax.experimental.pallas import tpu as pltpu

FEAT = 256          # flattened feature size (c * h * w must equal this)
IN_FEAT = 2 * FEAT  # concatenated feature size of linear_1
TM_MAX = 1024       # max batch tile (per-step VMEM ~6 MiB incl. double-buffer)


def _round_up(x, m):
    return ((x + m - 1) // m) * m


def _rmw_gf_kernel(x1_ref, x2_ref, w1a_ref, w1b_ref, b1_ref, w2_ref, b2_ref,
                   o_ref):
    # x1_ref, x2_ref : (TM, 256) f32       w1a_ref, w1b_ref : (256, 256) bf16
    # b1_ref, b2_ref : (1, 256) f32        w2_ref           : (256, 256) bf16
    # o_ref          : (TM, 256) f32
    x1 = x1_ref[...].astype(jnp.bfloat16)   # cast in-register for the MXU
    x2 = x2_ref[...].astype(jnp.bfloat16)
    h = jnp.tanh(
        jnp.dot(x1, w1a_ref[...], preferred_element_type=jnp.float32)
        + jnp.dot(x2, w1b_ref[...], preferred_element_type=jnp.float32)
        + b1_ref[...]
    )
    out = (
        jnp.dot(h.astype(w2_ref.dtype), w2_ref[...],
                preferred_element_type=jnp.float32)
        + b2_ref[...]
    )
    o_ref[...] = out.astype(o_ref.dtype)


def rmw_gf_forward(x1, x2, w1, b1, w2, b2):
    """Pallas implementation of RMW_GF.forward.

    x1, x2 : (bs, c, h, w) float32 with c*h*w == 256
    w1     : (512, 256)  == torch linear_1.weight.T
    b1     : (256,)
    w2     : (256, 256)  == torch linear_2.weight.T
    b2     : (256,)
    returns (bs, c, h, w) float32
    """
    bs, c, h, w = x1.shape
    assert c * h * w == FEAT, "RMW_GF requires c*h*w == 256"

    # --- glue: flatten (matches nn.Flatten, row-major over C,H,W) ----------
    x1f = x1.reshape(bs, FEAT)
    x2f = x2.reshape(bs, FEAT)

    # Batch tile: multiple of 8 sublanes, capped at TM_MAX; pad bs up to a
    # whole number of tiles so every grid step sees a full (TM, 256) block.
    tm = min(TM_MAX, _round_up(bs, 8))
    bs_p = _round_up(bs, tm)
    if bs_p != bs:
        pad = ((0, bs_p - bs), (0, 0))
        x1f = jnp.pad(x1f, pad)
        x2f = jnp.pad(x2f, pad)

    # Weights go to bf16 once in the wrapper (tiny, reused across all grid
    # steps); activations stay f32 in HBM and are cast inside the kernel.
    w1a = w1[:FEAT, :].astype(jnp.bfloat16)   # acts on x1 part of the concat
    w1b = w1[FEAT:, :].astype(jnp.bfloat16)   # acts on x2 part of the concat
    w2b = w2.astype(jnp.bfloat16)
    b1_2d = b1.reshape(1, FEAT).astype(jnp.float32)
    b2_2d = b2.reshape(1, FEAT).astype(jnp.float32)

    grid = (bs_p // tm,)

    flops = 2 * bs_p * (IN_FEAT * FEAT + FEAT * FEAT)
    bytes_accessed = (
        2 * bs_p * FEAT * 4        # x1, x2 tiles (f32)
        + bs_p * FEAT * 4          # output (f32)
        + 3 * FEAT * FEAT * 2      # w1a, w1b, w2 (bf16)
        + 2 * FEAT * 4             # biases (f32)
    )
    cost = pl.CostEstimate(
        flops=flops,
        transcendentals=bs_p * FEAT,   # tanh
        bytes_accessed=bytes_accessed,
    )

    out = pl.pallas_call(
        _rmw_gf_kernel,
        out_shape=jax.ShapeDtypeStruct((bs_p, FEAT), jnp.float32),
        grid=grid,
        in_specs=[
            pl.BlockSpec((tm, FEAT), lambda i: (i, 0)),     # x1 tile
            pl.BlockSpec((tm, FEAT), lambda i: (i, 0)),     # x2 tile
            pl.BlockSpec((FEAT, FEAT), lambda i: (0, 0)),   # w1a (resident)
            pl.BlockSpec((FEAT, FEAT), lambda i: (0, 0)),   # w1b (resident)
            pl.BlockSpec((1, FEAT), lambda i: (0, 0)),      # b1  (resident)
            pl.BlockSpec((FEAT, FEAT), lambda i: (0, 0)),   # w2  (resident)
            pl.BlockSpec((1, FEAT), lambda i: (0, 0)),      # b2  (resident)
        ],
        out_specs=pl.BlockSpec((tm, FEAT), lambda i: (i, 0)),
        compiler_params=pltpu.CompilerParams(
            dimension_semantics=("parallel",),
        ),
        cost_estimate=cost,
    )(x1f, x2f, w1a, w1b, b1_2d, w2b, b2_2d)

    # --- glue: drop batch padding, reshape back to NCHW --------------------
    return out[:bs].reshape(bs, c, h, w)


def init_params(key):
    """Deterministic parameter init matching the torch module's shapes.

    linear_1: Linear(512, 256) -> weight (256, 512), bias (256,)
    linear_2: Linear(256, 256) -> weight (256, 256), bias (256,)
    Stored here as transposed weights (in_features, out_features).
    """
    k1, k2, k3, k4 = jax.random.split(key, 4)
    bound1 = 1.0 / jnp.sqrt(IN_FEAT)
    bound2 = 1.0 / jnp.sqrt(FEAT)
    w1 = jax.random.uniform(k1, (IN_FEAT, FEAT), jnp.float32, -bound1, bound1)
    b1 = jax.random.uniform(k2, (FEAT,), jnp.float32, -bound1, bound1)
    w2 = jax.random.uniform(k3, (FEAT, FEAT), jnp.float32, -bound2, bound2)
    b2 = jax.random.uniform(k4, (FEAT,), jnp.float32, -bound2, bound2)
    return w1, b1, w2, b2


if __name__ == "__main__":
    key = jax.random.PRNGKey(0)
    kx1, kx2, kp = jax.random.split(key, 3)

    # Small shapes consistent with the module: c*h*w must equal 256.
    bs, c, h, w = 2, 4, 8, 8
    x1 = jax.random.normal(kx1, (bs, c, h, w), jnp.float32)
    x2 = jax.random.normal(kx2, (bs, c, h, w), jnp.float32)

    w1, b1, w2, b2 = init_params(kp)

    out = rmw_gf_forward(x1, x2, w1, b1, w2, b2)
    jax.block_until_ready(out)

    # Sanity check against plain-JAX f32 reference of the same math.
    # Tolerance is loosened because the kernel runs its matmuls in bf16
    # (f32 accumulation), matching native MXU precision.
    x = jnp.concatenate([x1.reshape(bs, -1), x2.reshape(bs, -1)], axis=1)
    ref = (jnp.tanh(x @ w1 + b1) @ w2 + b2).reshape(bs, c, h, w)
    assert out.shape == (bs, c, h, w)
    assert jnp.allclose(out, ref, atol=5e-2, rtol=5e-2)

    print("KERNEL_OK")
</pallas_src>

<mosaic_0001>
module attributes {stable_mosaic.version = 11 : i64} {
  func.func @_rmw_gf_kernel(%arg0: i32, %arg1: memref<8x256xf32, #tpu.memory_space<vmem>>, %arg2: memref<8x256xf32, #tpu.memory_space<vmem>>, %arg3: memref<256x256xbf16, #tpu.memory_space<vmem>>, %arg4: memref<256x256xbf16, #tpu.memory_space<vmem>>, %arg5: memref<1x256xf32, #tpu.memory_space<vmem>>, %arg6: memref<256x256xbf16, #tpu.memory_space<vmem>>, %arg7: memref<1x256xf32, #tpu.memory_space<vmem>>, %arg8: memref<8x256xf32, #tpu.memory_space<vmem>>) attributes {dimension_semantics = [#tpu.dimension_semantics<parallel>], iteration_bounds = array<i64: 1>, scalar_prefetch = 0 : i64, scratch_operands = 0 : i64, tpu.core_type = #tpu.core_type<tc>, window_params = [{transform_indices = @transform_0, window_bounds = array<i64: 8, 256>}, {transform_indices = @transform_1, window_bounds = array<i64: 8, 256>}, {pipeline_mode = #tpu.pipeline_mode<synchronous>, transform_indices = @transform_2, window_bounds = array<i64: 256, 256>}, {pipeline_mode = #tpu.pipeline_mode<synchronous>, transform_indices = @transform_3, window_bounds = array<i64: 256, 256>}, {pipeline_mode = #tpu.pipeline_mode<synchronous>, transform_indices = @transform_4, window_bounds = array<i64: 1, 256>}, {pipeline_mode = #tpu.pipeline_mode<synchronous>, transform_indices = @transform_5, window_bounds = array<i64: 256, 256>}, {pipeline_mode = #tpu.pipeline_mode<synchronous>, transform_indices = @transform_6, window_bounds = array<i64: 1, 256>}, {transform_indices = @transform_7, window_bounds = array<i64: 8, 256>}]} {
    %c0 = arith.constant 0 : index
    %c0_0 = arith.constant 0 : index
    %0 = vector.load %arg1[%c0, %c0_0] : memref<8x256xf32, #tpu.memory_space<vmem>>, vector<8x256xf32>
    %1 = arith.truncf %0 : vector<8x256xf32> to vector<8x256xbf16>
    %c0_1 = arith.constant 0 : index
    %c0_2 = arith.constant 0 : index
    %2 = vector.load %arg2[%c0_1, %c0_2] : memref<8x256xf32, #tpu.memory_space<vmem>>, vector<8x256xf32>
    %3 = arith.truncf %2 : vector<8x256xf32> to vector<8x256xbf16>
    %c0_3 = arith.constant 0 : index
    %c0_4 = arith.constant 0 : index
    %4 = vector.load %arg3[%c0_3, %c0_4] : memref<256x256xbf16, #tpu.memory_space<vmem>>, vector<256x256xbf16>
    %cst = arith.constant dense<0.000000e+00> : vector<8x256xf32>
    %5 = tpu.matmul %1, %4, %cst {dimension_numbers = #tpu.dot_dimension_numbers<[1], [0], [0], [1], [0, 0, 1, 1], [], []>} : vector<8x256xbf16>, vector<256x256xbf16>, vector<8x256xf32> -> vector<8x256xf32>
    %c0_5 = arith.constant 0 : index
    %c0_6 = arith.constant 0 : index
    %6 = vector.load %arg4[%c0_5, %c0_6] : memref<256x256xbf16, #tpu.memory_space<vmem>>, vector<256x256xbf16>
    %cst_7 = arith.constant dense<0.000000e+00> : vector<8x256xf32>
    %7 = tpu.matmul %3, %6, %cst_7 {dimension_numbers = #tpu.dot_dimension_numbers<[1], [0], [0], [1], [0, 0, 1, 1], [], []>} : vector<8x256xbf16>, vector<256x256xbf16>, vector<8x256xf32> -> vector<8x256xf32>
    %8 = arith.addf %5, %7 : vector<8x256xf32>
    %c0_8 = arith.constant 0 : index
    %c0_9 = arith.constant 0 : index
    %9 = vector.load %arg5[%c0_8, %c0_9] : memref<1x256xf32, #tpu.memory_space<vmem>>, vector<1x256xf32>
    %10 = vector.broadcast %9 : vector<1x256xf32> to vector<8x256xf32>
    %11 = arith.addf %8, %10 : vector<8x256xf32>
    %12 = math.tanh %11 : vector<8x256xf32>
    %13 = arith.truncf %12 : vector<8x256xf32> to vector<8x256xbf16>
    %c0_10 = arith.constant 0 : index
    %c0_11 = arith.constant 0 : index
    %14 = vector.load %arg6[%c0_10, %c0_11] : memref<256x256xbf16, #tpu.memory_space<vmem>>, vector<256x256xbf16>
    %cst_12 = arith.constant dense<0.000000e+00> : vector<8x256xf32>
    %15 = tpu.matmul %13, %14, %cst_12 {dimension_numbers = #tpu.dot_dimension_numbers<[1], [0], [0], [1], [0, 0, 1, 1], [], []>} : vector<8x256xbf16>, vector<256x256xbf16>, vector<8x256xf32> -> vector<8x256xf32>
    %c0_13 = arith.constant 0 : index
    %c0_14 = arith.constant 0 : index
    %16 = vector.load %arg7[%c0_13, %c0_14] : memref<1x256xf32, #tpu.memory_space<vmem>>, vector<1x256xf32>
    %17 = vector.broadcast %16 : vector<1x256xf32> to vector<8x256xf32>
    %18 = arith.addf %15, %17 : vector<8x256xf32>
    %c0_15 = arith.constant 0 : index
    %c0_16 = arith.constant 0 : index
    %19 = vector.load %arg8[%c0_15, %c0_16] : memref<8x256xf32, #tpu.memory_space<vmem>>, vector<8x256xf32>
    tpu.vector_store %arg8[%c0_15, %c0_16], %18 {strides = array<i32>} : memref<8x256xf32, #tpu.memory_space<vmem>>, vector<8x256xf32>,
    return
  }
  func.func @transform_0(%arg0: i32) -> (i32, i32) {
    %c0_i32 = arith.constant 0 : i32
    %c0_i32_0 = arith.constant 0 : i32
    return %arg0, %c0_i32 : i32, i32
  }
  func.func @transform_1(%arg0: i32) -> (i32, i32) {
    %c0_i32 = arith.constant 0 : i32
    %c0_i32_0 = arith.constant 0 : i32
    return %arg0, %c0_i32 : i32, i32
  }
  func.func @transform_2(%arg0: i32) -> (i32, i32) {
    %c0_i32 = arith.constant 0 : i32
    %c0_i32_0 = arith.constant 0 : i32
    %c0_i32_1 = arith.constant 0 : i32
    return %c0_i32, %c0_i32_0 : i32, i32
  }
  func.func @transform_3(%arg0: i32) -> (i32, i32) {
    %c0_i32 = arith.constant 0 : i32
    %c0_i32_0 = arith.constant 0 : i32
    %c0_i32_1 = arith.constant 0 : i32
    return %c0_i32, %c0_i32_0 : i32, i32
  }
  func.func @transform_4(%arg0: i32) -> (i32, i32) {
    %c0_i32 = arith.constant 0 : i32
    %c0_i32_0 = arith.constant 0 : i32
    %c0_i32_1 = arith.constant 0 : i32
    return %c0_i32, %c0_i32_0 : i32, i32
  }
  func.func @transform_5(%arg0: i32) -> (i32, i32) {
    %c0_i32 = arith.constant 0 : i32
    %c0_i32_0 = arith.constant 0 : i32
    %c0_i32_1 = arith.constant 0 : i32
    return %c0_i32, %c0_i32_0 : i32, i32
  }
  func.func @transform_6(%arg0: i32) -> (i32, i32) {
    %c0_i32 = arith.constant 0 : i32
    %c0_i32_0 = arith.constant 0 : i32
    %c0_i32_1 = arith.constant 0 : i32
    return %c0_i32, %c0_i32_0 : i32, i32
  }
  func.func @transform_7(%arg0: i32) -> (i32, i32) {
    %c0_i32 = arith.constant 0 : i32
    %c0_i32_0 = arith.constant 0 : i32
    return %arg0, %c0_i32 : i32, i32
  }
}

</mosaic_0001>

<llo_original>
// kernel: tpu_custom_call.1
$region0: #{tpu_custom_call.1}
  #allocation0 [shape = 'u32[]', space=smem, size = 0x4, offset = 0x4, fixed_abs, tag = 'smem constant byte address 0x4 - core index']
  #allocation1 [shape = 'u32[72,128]{1,0:T(1,128)}', space=vmem, size = 0x9000, scoped, tag = 'internal scratch']
  %s0 = inlined_call_operand.hbm [shape: f32[8,256], index: 0, kind: input, shape index: {}]
  %s1 = inlined_call_operand.hbm [shape: f32[8,256], index: 1, kind: input, shape index: {}]
  %s2 = inlined_call_operand.hbm [shape: bf16[256,256], index: 2, kind: input, shape index: {}]
  %s3 = inlined_call_operand.hbm [shape: bf16[256,256], index: 3, kind: input, shape index: {}]
  %s4 = inlined_call_operand.vmem [shape: f32[1,256], index: 4, kind: input, shape index: {}]
  %s5 = inlined_call_operand.hbm [shape: bf16[256,256], index: 5, kind: input, shape index: {}]
  %s6 = inlined_call_operand.vmem [shape: f32[1,256], index: 6, kind: input, shape index: {}]
  %s7 = inlined_call_operand.hbm [shape: f32[8,256], index: 7, kind: output, shape index: {}]
  %s8 = sld [smem:[#allocation0]]
  $region58: #{tpu_custom_call.1} parent=0
    _
  %s10 = ssub.s32 1, %s8
  %s11 = scalar_select 0, %s10, %s8
  $region1: #{tpu_custom_call.1} parent=0
    #allocation2 [shape = 'u8[8192]{0}', space=vmem, size = 0x2000, scoped, tag = 'input window, operand 0, single buffered']
    #allocation3 [shape = 's32[1]{0}', space=sflag, size = 0x4, scoped, tag = 'scoped memory for tpu_custom_call.1']
    #allocation4 [shape = 's32[1]{0}', space=sflag, size = 0x4, scoped, tag = 'scoped memory for tpu_custom_call.1']
    #allocation5 [shape = 'u8[8192]{0}', space=vmem, size = 0x2000, scoped, tag = 'input window, operand 1, single buffered']
    #allocation6 [shape = 's32[1]{0}', space=sflag, size = 0x4, scoped, tag = 'scoped memory for tpu_custom_call.1']
    #allocation7 [shape = 'u8[131072]{0}', space=vmem, size = 0x20000, scoped, tag = 'input window, operand 2, single buffered']
    #allocation8 [shape = 'u8[131072]{0}', space=vmem, size = 0x20000, scoped, tag = 'input window, operand 3, single buffered']
    #allocation9 [shape = 's32[1]{0}', space=sflag, size = 0x4, scoped, tag = 'scoped memory for tpu_custom_call.1']
    #allocation10 [shape = 'u8[131072]{0}', space=vmem, size = 0x20000, scoped, tag = 'input window, operand 5, single buffered']
    #allocation11 [shape = 'u8[8192]{0}', space=vmem, size = 0x2000, scoped, tag = 'output window, operand 0, single buffered']
    %12 = vsyncpa [#allocation3], 0
    %13 = vsyncpa [#allocation6], 0
    %14 = vsyncpa [#allocation9], 0
    %15 = vsyncpa [#allocation4], 0
    // Predicated region
    $region2: #{tpu_custom_call.1} parent=1 // pred_check
      _
    $region3: #{tpu_custom_call.1} parent=1 // pred_check_branch
      %17 = sbr.rel (0) target = $region5
    $region4: #{tpu_custom_call.1} parent=1 // pred_region
      %19 = vsyncadd [#allocation3], 0
      %s21 = sshll.u32 %s0, 4
      %s22 = int_to_ptr.hbm [resolvable:$true] %s21
      %s23 = sshll.u32 [#allocation2], 4
      %s24 = int_to_ptr.vmem [resolvable:$true] %s23
      %26 = dma.hbm_to_vmem [thread:$0]  %s22, 256, %s24, [#allocation3]
    $region5: #{tpu_custom_call.1} parent=1 // pred_fallthru
      _
    // Predicated region
    $region6: #{tpu_custom_call.1} parent=1 // pred_check
      _
    $region7: #{tpu_custom_call.1} parent=1 // pred_check_branch
      %28 = sbr.rel (0) target = $region9
    $region8: #{tpu_custom_call.1} parent=1 // pred_region
      %30 = vsyncadd [#allocation6], 0
      %s32 = sshll.u32 %s1, 4
      %s33 = int_to_ptr.hbm [resolvable:$true] %s32
      %s34 = sshll.u32 [#allocation5], 4
      %s35 = int_to_ptr.vmem [resolvable:$true] %s34
      %37 = dma.hbm_to_vmem [thread:$0]  %s33, 256, %s35, [#allocation6]
    $region9: #{tpu_custom_call.1} parent=1 // pred_fallthru
      _
    // Predicated region
    $region10: #{tpu_custom_call.1} parent=1 // pred_check
      _
    $region11: #{tpu_custom_call.1} parent=1 // pred_check_branch
      %39 = sbr.rel (0) target = $region13
    $region12: #{tpu_custom_call.1} parent=1 // pred_region
      %41 = vsyncadd [#allocation6], 0
      %s42 = sshll.u32 %s2, 4
      %s43 = int_to_ptr.hbm [resolvable:$true] %s42
      %s44 = sshll.u32 [#allocation7], 4
      %s45 = int_to_ptr.vmem [resolvable:$true] %s44
      %50 = dma.hbm_to_vmem [thread:$0]  %s43, 4096, %s45, [#allocation6], 128, 128, 8
    $region13: #{tpu_custom_call.1} parent=1 // pred_fallthru
      _
    // Predicated region
    $region14: #{tpu_custom_call.1} parent=1 // pred_check
      _
    $region15: #{tpu_custom_call.1} parent=1 // pred_check_branch
      %52 = sbr.rel (0) target = $region17
    $region16: #{tpu_custom_call.1} parent=1 // pred_region
      %54 = vsyncadd [#allocation9], 0
      %s55 = sshll.u32 %s3, 4
      %s56 = int_to_ptr.hbm [resolvable:$true] %s55
      %s57 = sshll.u32 [#allocation8], 4
      %s58 = int_to_ptr.vmem [resolvable:$true] %s57
      %63 = dma.hbm_to_vmem [thread:$0]  %s56, 4096, %s58, [#allocation9], 128, 128, 8
    $region17: #{tpu_custom_call.1} parent=1 // pred_fallthru
      _
    // Predicated region
    $region18: #{tpu_custom_call.1} parent=1 // pred_check
      _
    $region19: #{tpu_custom_call.1} parent=1 // pred_check_branch
      %65 = sbr.rel (0) target = $region21
    $region20: #{tpu_custom_call.1} parent=1 // pred_region
      _
    $region21: #{tpu_custom_call.1} parent=1 // pred_fallthru
      _
    // Predicated region
    $region22: #{tpu_custom_call.1} parent=1 // pred_check
      _
    $region23: #{tpu_custom_call.1} parent=1 // pred_check_branch
      %67 = sbr.rel (0) target = $region25
    $region24: #{tpu_custom_call.1} parent=1 // pred_region
      %69 = vsyncadd [#allocation9], 0
      %s70 = sshll.u32 %s5, 4
      %s71 = int_to_ptr.hbm [resolvable:$true] %s70
      %s72 = sshll.u32 [#allocation10], 4
      %s73 = int_to_ptr.vmem [resolvable:$true] %s72
      %78 = dma.hbm_to_vmem [thread:$0]  %s71, 4096, %s73, [#allocation9], 128, 128, 8
    $region25: #{tpu_custom_call.1} parent=1 // pred_fallthru
      _
    // Predicated region
    $region26: #{tpu_custom_call.1} parent=1 // pred_check
      _
    $region27: #{tpu_custom_call.1} parent=1 // pred_check_branch
      %80 = sbr.rel (0) target = $region29
    $region28: #{tpu_custom_call.1} parent=1 // pred_region
      _
    $region29: #{tpu_custom_call.1} parent=1 // pred_fallthru
      _
    // Predicated region
    $region30: #{tpu_custom_call.1} parent=1 // pred_check
      _
    $region31: #{tpu_custom_call.1} parent=1 // pred_check_branch
      %82 = sbr.rel (0) target = $region33
    $region32: #{tpu_custom_call.1} parent=1 // pred_region
      %84 = dma.done [#allocation3], 256
    $region33: #{tpu_custom_call.1} parent=1 // pred_fallthru
      _
    // Predicated region
    $region34: #{tpu_custom_call.1} parent=1 // pred_check
      _
    $region35: #{tpu_custom_call.1} parent=1 // pred_check_branch
      %86 = sbr.rel (0) target = $region37
    $region36: #{tpu_custom_call.1} parent=1 // pred_region
      %88 = dma.done [#allocation6], 256
    $region37: #{tpu_custom_call.1} parent=1 // pred_fallthru
      _
    // Predicated region
    $region38: #{tpu_custom_call.1} parent=1 // pred_check
      _
    $region39: #{tpu_custom_call.1} parent=1 // pred_check_branch
      %90 = sbr.rel (0) target = $region41
    $region40: #{tpu_custom_call.1} parent=1 // pred_region
      %92 = dma.done [#allocation6], 4096
    $region41: #{tpu_custom_call.1} parent=1 // pred_fallthru
      _
    // Predicated region
    $region42: #{tpu_custom_call.1} parent=1 // pred_check
      _
    $region43: #{tpu_custom_call.1} parent=1 // pred_check_branch
      %94 = sbr.rel (0) target = $region45
    $region44: #{tpu_custom_call.1} parent=1 // pred_region
      %96 = dma.done [#allocation9], 4096
    $region45: #{tpu_custom_call.1} parent=1 // pred_fallthru
      _
    // Predicated region
    $region46: #{tpu_custom_call.1} parent=1 // pred_check
      _
    $region47: #{tpu_custom_call.1} parent=1 // pred_check_branch
      %98 = sbr.rel (0) target = $region49
    $region48: #{tpu_custom_call.1} parent=1 // pred_region
      %100 = dma.done [#allocation9], 4096
    $region49: #{tpu_custom_call.1} parent=1 // pred_fallthru
      _
    %v101 = vld [vmem:[#allocation2] sm:$0xff]
    %v102 = vld [vmem:[#allocation2 + $0x8] sm:$0xff]
    %v103 = vpack.c.bf16 %v101, %v101
    %v104 = vpack.c.bf16 %v102, %v102
    %v105 = vld [vmem:[#allocation5] sm:$0xff]
    %v106 = vld [vmem:[#allocation5 + $0x8] sm:$0xff]
    %v107 = vpack.c.bf16 %v105, %v105
    %v108 = vpack.c.bf16 %v106, %v106
    %v109 = vld [vmem:[#allocation7] sm:$0xff]
    %v110 = vld [vmem:[#allocation7 + $0x8] sm:$0xff]
    %v111 = vld [vmem:[#allocation7 + $0x10] sm:$0xff]
    %v112 = vld [vmem:[#allocation7 + $0x18] sm:$0xff]
    %v113 = vld [vmem:[#allocation7 + $0x20] sm:$0xff]
    %v114 = vld [vmem:[#allocation7 + $0x28] sm:$0xff]
    %v115 = vld [vmem:[#allocation7 + $0x30] sm:$0xff]
    %v116 = vld [vmem:[#allocation7 + $0x38] sm:$0xff]
    %v117 = vld [vmem:[#allocation7 + $0x40] sm:$0xff]
    %v118 = vld [vmem:[#allocation7 + $0x48] sm:$0xff]
    %v119 = vld [vmem:[#allocation7 + $0x50] sm:$0xff]
    %v120 = vld [vmem:[#allocation7 + $0x58] sm:$0xff]
    %v121 = vld [vmem:[#allocation7 + $0x60] sm:$0xff]
    %v122 = vld [vmem:[#allocation7 + $0x68] sm:$0xff]
    %v123 = vld [vmem:[#allocation7 + $0x70] sm:$0xff]
    %v124 = vld [vmem:[#allocation7 + $0x78] sm:$0xff]
    %v125 = vld [vmem:[#allocation7 + $0x80] sm:$0xff]
    %v126 = vld [vmem:[#allocation7 + $0x88] sm:$0xff]
    %v127 = vld [vmem:[#allocation7 + $0x90] sm:$0xff]
    %v128 = vld [vmem:[#allocation7 + $0x98] sm:$0xff]
    %v129 = vld [vmem:[#allocation7 + $0xa0] sm:$0xff]
    %v130 = vld [vmem:[#allocation7 + $0xa8] sm:$0xff]
    %v131 = vld [vmem:[#allocation7 + $0xb0] sm:$0xff]
    %v132 = vld [vmem:[#allocation7 + $0xb8] sm:$0xff]
    %v133 = vld [vmem:[#allocation7 + $0xc0] sm:$0xff]
    %v134 = vld [vmem:[#allocation7 + $0xc8] sm:$0xff]
    %v135 = vld [vmem:[#allocation7 + $0xd0] sm:$0xff]
    %v136 = vld [vmem:[#allocation7 + $0xd8] sm:$0xff]
    %v137 = vld [vmem:[#allocation7 + $0xe0] sm:$0xff]
    %v138 = vld [vmem:[#allocation7 + $0xe8] sm:$0xff]
    %v139 = vld [vmem:[#allocation7 + $0xf0] sm:$0xff]
    %v140 = vld [vmem:[#allocation7 + $0xf8] sm:$0xff]
    %v141 = vld [vmem:[#allocation8] sm:$0xff]
    %v142 = vld [vmem:[#allocation8 + $0x8] sm:$0xff]
    %v143 = vld [vmem:[#allocation8 + $0x10] sm:$0xff]
    %v144 = vld [vmem:[#allocation8 + $0x18] sm:$0xff]
    %v145 = vld [vmem:[#allocation8 + $0x20] sm:$0xff]
    %v146 = vld [vmem:[#allocation8 + $0x28] sm:$0xff]
    %v147 = vld [vmem:[#allocation8 + $0x30] sm:$0xff]
    %v148 = vld [vmem:[#allocation8 + $0x38] sm:$0xff]
    %v149 = vld [vmem:[#allocation8 + $0x40] sm:$0xff]
    %v150 = vld [vmem:[#allocation8 + $0x48] sm:$0xff]
    %v151 = vld [vmem:[#allocation8 + $0x50] sm:$0xff]
    %v152 = vld [vmem:[#allocation8 + $0x58] sm:$0xff]
    %v153 = vld [vmem:[#allocation8 + $0x60] sm:$0xff]
    %v154 = vld [vmem:[#allocation8 + $0x68] sm:$0xff]
    %v155 = vld [vmem:[#allocation8 + $0x70] sm:$0xff]
    %v156 = vld [vmem:[#allocation8 + $0x78] sm:$0xff]
    %v157 = vld [vmem:[#allocation8 + $0x80] sm:$0xff]
    %v158 = vld [vmem:[#allocation8 + $0x88] sm:$0xff]
    %v159 = vld [vmem:[#allocation8 + $0x90] sm:$0xff]
    %v160 = vld [vmem:[#allocation8 + $0x98] sm:$0xff]
    %v161 = vld [vmem:[#allocation8 + $0xa0] sm:$0xff]
    %v162 = vld [vmem:[#allocation8 + $0xa8] sm:$0xff]
    %v163 = vld [vmem:[#allocation8 + $0xb0] sm:$0xff]
    %v164 = vld [vmem:[#allocation8 + $0xb8] sm:$0xff]
    %v165 = vld [vmem:[#allocation8 + $0xc0] sm:$0xff]
    %v166 = vld [vmem:[#allocation8 + $0xc8] sm:$0xff]
    %v167 = vld [vmem:[#allocation8 + $0xd0] sm:$0xff]
    %v168 = vld [vmem:[#allocation8 + $0xd8] sm:$0xff]
    %v169 = vld [vmem:[#allocation8 + $0xe0] sm:$0xff]
    %v170 = vld [vmem:[#allocation8 + $0xe8] sm:$0xff]
    %v171 = vld [vmem:[#allocation8 + $0xf0] sm:$0xff]
    %v172 = vld [vmem:[#allocation8 + $0xf8] sm:$0xff]
    %v205 = vunpack.c.l.b16 %v141
    %v206 = vunpack.c.h.b16 %v141
    %v207 = vunpack.c.l.b16 %v142
    %v208 = vunpack.c.h.b16 %v142
    %v209 = vunpack.c.l.b16 %v143
    %v210 = vunpack.c.h.b16 %v143
    %v211 = vunpack.c.l.b16 %v144
    %v212 = vunpack.c.h.b16 %v144
    %v213 = vunpack.c.l.b16 %v145
    %v214 = vunpack.c.h.b16 %v145
    %v215 = vunpack.c.l.b16 %v146
    %v216 = vunpack.c.h.b16 %v146
    %v217 = vunpack.c.l.b16 %v147
    %v218 = vunpack.c.h.b16 %v147
    %v219 = vunpack.c.l.b16 %v148
    %v220 = vunpack.c.h.b16 %v148
    %v221 = vunpack.c.l.b16 %v149
    %v222 = vunpack.c.h.b16 %v149
    %v223 = vunpack.c.l.b16 %v150
    %v224 = vunpack.c.h.b16 %v150
    %v225 = vunpack.c.l.b16 %v151
    %v226 = vunpack.c.h.b16 %v151
    %v227 = vunpack.c.l.b16 %v152
    %v228 = vunpack.c.h.b16 %v152
    %v229 = vunpack.c.l.b16 %v153
    %v230 = vunpack.c.h.b16 %v153
    %v231 = vunpack.c.l.b16 %v154
    %v232 = vunpack.c.h.b16 %v154
    %v233 = vunpack.c.l.b16 %v155
    %v234 = vunpack.c.h.b16 %v155
    %v235 = vunpack.c.l.b16 %v156
    %v236 = vunpack.c.h.b16 %v156
    %v237 = vunpack.c.l.b16 %v157
    %v238 = vunpack.c.h.b16 %v157
    %v239 = vunpack.c.l.b16 %v158
    %v240 = vunpack.c.h.b16 %v158
    %v241 = vunpack.c.l.b16 %v159
    %v242 = vunpack.c.h.b16 %v159
    %v243 = vunpack.c.l.b16 %v160
    %v244 = vunpack.c.h.b16 %v160
    %v245 = vunpack.c.l.b16 %v161
    %v246 = vunpack.c.h.b16 %v161
    %v247 = vunpack.c.l.b16 %v162
    %v248 = vunpack.c.h.b16 %v162
    %v249 = vunpack.c.l.b16 %v163
    %v250 = vunpack.c.h.b16 %v163
    %v251 = vunpack.c.l.b16 %v164
    %v252 = vunpack.c.h.b16 %v164
    %v253 = vunpack.c.l.b16 %v165
    %v254 = vunpack.c.h.b16 %v165
    %v255 = vunpack.c.l.b16 %v166
    %v256 = vunpack.c.h.b16 %v166
    %v257 = vunpack.c.l.b16 %v167
    %v258 = vunpack.c.h.b16 %v167
    %v259 = vunpack.c.l.b16 %v168
    %v260 = vunpack.c.h.b16 %v168
    %v261 = vunpack.c.l.b16 %v169
    %v262 = vunpack.c.h.b16 %v169
    %v263 = vunpack.c.l.b16 %v170
    %v264 = vunpack.c.h.b16 %v170
    %v265 = vunpack.c.l.b16 %v171
    %v266 = vunpack.c.h.b16 %v171
    %v267 = vunpack.c.l.b16 %v172
    %v268 = vunpack.c.h.b16 %v172
    %v269 = vpack.c.b16 %v207, %v205
    %v270 = vpack.c.b16 %v208, %v206
    %v271 = vpack.c.b16 %v211, %v209
    %v272 = vpack.c.b16 %v212, %v210
    %v273 = vpack.c.b16 %v215, %v213
    %v274 = vpack.c.b16 %v216, %v214
    %v275 = vpack.c.b16 %v219, %v217
    %v276 = vpack.c.b16 %v220, %v218
    %v277 = vpack.c.b16 %v223, %v221
    %v278 = vpack.c.b16 %v224, %v222
    %v279 = vpack.c.b16 %v227, %v225
    %v280 = vpack.c.b16 %v228, %v226
    %v281 = vpack.c.b16 %v231, %v229
    %v282 = vpack.c.b16 %v232, %v230
    %v283 = vpack.c.b16 %v235, %v233
    %v284 = vpack.c.b16 %v236, %v234
    %v285 = vpack.c.b16 %v239, %v237
    %v286 = vpack.c.b16 %v240, %v238
    %v287 = vpack.c.b16 %v243, %v241
    %v288 = vpack.c.b16 %v244, %v242
    %v289 = vpack.c.b16 %v247, %v245
    %v290 = vpack.c.b16 %v248, %v246
    %v291 = vpack.c.b16 %v251, %v249
    %v292 = vpack.c.b16 %v252, %v250
    %v293 = vpack.c.b16 %v255, %v253
    %v294 = vpack.c.b16 %v256, %v254
    %v295 = vpack.c.b16 %v259, %v257
    %v296 = vpack.c.b16 %v260, %v258
    %v297 = vpack.c.b16 %v263, %v261
    %v298 = vpack.c.b16 %v264, %v262
    %v299 = vpack.c.b16 %v267, %v265
    %v300 = vpack.c.b16 %v268, %v266
    %333 = vmatpush.bf16.msra.mxu0 %v283
    %334 = vmatpush.bf16.msra.mxu0 %v281
    %335 = vmatpush.bf16.msra.mxu0 %v279
    %336 = vmatpush.bf16.msra.mxu0 %v277
    %337 = vmatpush.bf16.msra.mxu0 %v275
    %338 = vmatpush.bf16.msra.mxu0 %v273
    %339 = vmatpush.bf16.msra.mxu0 %v271
    %340 = vmatpush.bf16.msra.mxu0 %v269
    %341 = vmatmul.bf16.gmra.mxu0 %v107
    %v342 = vpop.f32.mrf.mxu0
    %v343 = vadd.f32 0.0, %v342
    %v344 = vpop.f32.mrf.mxu0
    %345 = vdwg.mxu0
    %346 = vmatpush.bf16.msra.mxu0 %v299
    %347 = vmatpush.bf16.msra.mxu0 %v297
    %348 = vmatpush.bf16.msra.mxu0 %v295
    %349 = vmatpush.bf16.msra.mxu0 %v293
    %350 = vmatpush.bf16.msra.mxu0 %v291
    %351 = vmatpush.bf16.msra.mxu0 %v289
    %352 = vmatpush.bf16.msra.mxu0 %v287
    %353 = vmatpush.bf16.msra.mxu0 %v285
    %354 = vmatmul.bf16.gmra.mxu0 %v108
    %v355 = vpop.f32.mrf.mxu0
    %v356 = vadd.f32 %v343, %v355
    %v357 = vpop.f32.mrf.mxu0
    %358 = vdwg.mxu0
    %359 = vmatpush.bf16.msra.mxu0 %v284
    %360 = vmatpush.bf16.msra.mxu0 %v282
    %361 = vmatpush.bf16.msra.mxu0 %v280
    %362 = vmatpush.bf16.msra.mxu0 %v278
    %363 = vmatpush.bf16.msra.mxu0 %v276
    %364 = vmatpush.bf16.msra.mxu0 %v274
    %365 = vmatpush.bf16.msra.mxu0 %v272
    %366 = vmatpush.bf16.msra.mxu0 %v270
    %367 = vmatmul.bf16.gmra.mxu0 %v107
    %v368 = vpop.f32.mrf.mxu0
    %v369 = vadd.f32 0.0, %v368
    %v370 = vpop.f32.mrf.mxu0
    %371 = vdwg.mxu0
    %372 = vmatpush.bf16.msra.mxu0 %v300
    %373 = vmatpush.bf16.msra.mxu0 %v298
    %374 = vmatpush.bf16.msra.mxu0 %v296
    %375 = vmatpush.bf16.msra.mxu0 %v294
    %376 = vmatpush.bf16.msra.mxu0 %v292
    %377 = vmatpush.bf16.msra.mxu0 %v290
    %378 = vmatpush.bf16.msra.mxu0 %v288
    %379 = vmatpush.bf16.msra.mxu0 %v286
    %380 = vmatmul.bf16.gmra.mxu0 %v108
    %v381 = vpop.f32.mrf.mxu0
    %v382 = vadd.f32 %v369, %v381
    %v383 = vpop.f32.mrf.mxu0
    %384 = vdwg.mxu0
    %v417 = vunpack.c.l.b16 %v109
    %v418 = vunpack.c.h.b16 %v109
    %v419 = vunpack.c.l.b16 %v110
    %v420 = vunpack.c.h.b16 %v110
    %v421 = vunpack.c.l.b16 %v111
    %v422 = vunpack.c.h.b16 %v111
    %v423 = vunpack.c.l.b16 %v112
    %v424 = vunpack.c.h.b16 %v112
    %v425 = vunpack.c.l.b16 %v113
    %v426 = vunpack.c.h.b16 %v113
    %v427 = vunpack.c.l.b16 %v114
    %v428 = vunpack.c.h.b16 %v114
    %v429 = vunpack.c.l.b16 %v115
    %v430 = vunpack.c.h.b16 %v115
    %v431 = vunpack.c.l.b16 %v116
    %v432 = vunpack.c.h.b16 %v116
    %v433 = vunpack.c.l.b16 %v117
    %v434 = vunpack.c.h.b16 %v117
    %v435 = vunpack.c.l.b16 %v118
    %v436 = vunpack.c.h.b16 %v118
    %v437 = vunpack.c.l.b16 %v119
    %v438 = vunpack.c.h.b16 %v119
    %v439 = vunpack.c.l.b16 %v120
    %v440 = vunpack.c.h.b16 %v120
    %v441 = vunpack.c.l.b16 %v121
    %v442 = vunpack.c.h.b16 %v121
    %v443 = vunpack.c.l.b16 %v122
    %v444 = vunpack.c.h.b16 %v122
    %v445 = vunpack.c.l.b16 %v123
    %v446 = vunpack.c.h.b16 %v123
    %v447 = vunpack.c.l.b16 %v124
    %v448 = vunpack.c.h.b16 %v124
    %v449 = vunpack.c.l.b16 %v125
    %v450 = vunpack.c.h.b16 %v125
    %v451 = vunpack.c.l.b16 %v126
    %v452 = vunpack.c.h.b16 %v126
    %v453 = vunpack.c.l.b16 %v127
    %v454 = vunpack.c.h.b16 %v127
    %v455 = vunpack.c.l.b16 %v128
    %v456 = vunpack.c.h.b16 %v128
    %v457 = vunpack.c.l.b16 %v129
    %v458 = vunpack.c.h.b16 %v129
    %v459 = vunpack.c.l.b16 %v130
    %v460 = vunpack.c.h.b16 %v130
    %v461 = vunpack.c.l.b16 %v131
    %v462 = vunpack.c.h.b16 %v131
    %v463 = vunpack.c.l.b16 %v132
    %v464 = vunpack.c.h.b16 %v132
    %v465 = vunpack.c.l.b16 %v133
    %v466 = vunpack.c.h.b16 %v133
    %v467 = vunpack.c.l.b16 %v134
    %v468 = vunpack.c.h.b16 %v134
    %v469 = vunpack.c.l.b16 %v135
    %v470 = vunpack.c.h.b16 %v135
    %v471 = vunpack.c.l.b16 %v136
    %v472 = vunpack.c.h.b16 %v136
    %v473 = vunpack.c.l.b16 %v137
    %v474 = vunpack.c.h.b16 %v137
    %v475 = vunpack.c.l.b16 %v138
    %v476 = vunpack.c.h.b16 %v138
    %v477 = vunpack.c.l.b16 %v139
    %v478 = vunpack.c.h.b16 %v139
    %v479 = vunpack.c.l.b16 %v140
    %v480 = vunpack.c.h.b16 %v140
    %v481 = vpack.c.b16 %v419, %v417
    %v482 = vpack.c.b16 %v420, %v418
    %v483 = vpack.c.b16 %v423, %v421
    %v484 = vpack.c.b16 %v424, %v422
    %v485 = vpack.c.b16 %v427, %v425
    %v486 = vpack.c.b16 %v428, %v426
    %v487 = vpack.c.b16 %v431, %v429
    %v488 = vpack.c.b16 %v432, %v430
    %v489 = vpack.c.b16 %v435, %v433
    %v490 = vpack.c.b16 %v436, %v434
    %v491 = vpack.c.b16 %v439, %v437
    %v492 = vpack.c.b16 %v440, %v438
    %v493 = vpack.c.b16 %v443, %v441
    %v494 = vpack.c.b16 %v444, %v442
    %v495 = vpack.c.b16 %v447, %v445
    %v496 = vpack.c.b16 %v448, %v446
    %v497 = vpack.c.b16 %v451, %v449
    %v498 = vpack.c.b16 %v452, %v450
    %v499 = vpack.c.b16 %v455, %v453
    %v500 = vpack.c.b16 %v456, %v454
    %v501 = vpack.c.b16 %v459, %v457
    %v502 = vpack.c.b16 %v460, %v458
    %v503 = vpack.c.b16 %v463, %v461
    %v504 = vpack.c.b16 %v464, %v462
    %v505 = vpack.c.b16 %v467, %v465
    %v506 = vpack.c.b16 %v468, %v466
    %v507 = vpack.c.b16 %v471, %v469
    %v508 = vpack.c.b16 %v472, %v470
    %v509 = vpack.c.b16 %v475, %v473
    %v510 = vpack.c.b16 %v476, %v474
    %v511 = vpack.c.b16 %v479, %v477
    %v512 = vpack.c.b16 %v480, %v478
    %545 = vmatpush.bf16.msra.mxu0 %v495
    %546 = vmatpush.bf16.msra.mxu0 %v493
    %547 = vmatpush.bf16.msra.mxu0 %v491
    %548 = vmatpush.bf16.msra.mxu0 %v489
    %549 = vmatpush.bf16.msra.mxu0 %v487
    %550 = vmatpush.bf16.msra.mxu0 %v485
    %551 = vmatpush.bf16.msra.mxu0 %v483
    %552 = vmatpush.bf16.msra.mxu0 %v481
    %553 = vmatmul.bf16.gmra.mxu0 %v103
    %v554 = vpop.f32.mrf.mxu0
    %v555 = vadd.f32 %v356, %v554
    %v556 = vpop.f32.mrf.mxu0
    %557 = vdwg.mxu0
    %558 = vmatpush.bf16.msra.mxu0 %v511
    %559 = vmatpush.bf16.msra.mxu0 %v509
    %560 = vmatpush.bf16.msra.mxu0 %v507
    %561 = vmatpush.bf16.msra.mxu0 %v505
    %562 = vmatpush.bf16.msra.mxu0 %v503
    %563 = vmatpush.bf16.msra.mxu0 %v501
    %564 = vmatpush.bf16.msra.mxu0 %v499
    %565 = vmatpush.bf16.msra.mxu0 %v497
    %566 = vmatmul.bf16.gmra.mxu0 %v104
    %v567 = vpop.f32.mrf.mxu0
    %v568 = vadd.f32 %v555, %v567
    %v569 = vpop.f32.mrf.mxu0
    %570 = vdwg.mxu0
    %571 = vmatpush.bf16.msra.mxu0 %v496
    %572 = vmatpush.bf16.msra.mxu0 %v494
    %573 = vmatpush.bf16.msra.mxu0 %v492
    %574 = vmatpush.bf16.msra.mxu0 %v490
    %575 = vmatpush.bf16.msra.mxu0 %v488
    %576 = vmatpush.bf16.msra.mxu0 %v486
    %577 = vmatpush.bf16.msra.mxu0 %v484
    %578 = vmatpush.bf16.msra.mxu0 %v482
    %579 = vmatmul.bf16.gmra.mxu0 %v103
    %v580 = vpop.f32.mrf.mxu0
    %v581 = vadd.f32 %v382, %v580
    %v582 = vpop.f32.mrf.mxu0
    %583 = vdwg.mxu0
    %584 = vmatpush.bf16.msra.mxu0 %v512
    %585 = vmatpush.bf16.msra.mxu0 %v510
    %586 = vmatpush.bf16.msra.mxu0 %v508
    %587 = vmatpush.bf16.msra.mxu0 %v506
    %588 = vmatpush.bf16.msra.mxu0 %v504
    %589 = vmatpush.bf16.msra.mxu0 %v502
    %590 = vmatpush.bf16.msra.mxu0 %v500
    %591 = vmatpush.bf16.msra.mxu0 %v498
    %592 = vmatmul.bf16.gmra.mxu0 %v104
    %v593 = vpop.f32.mrf.mxu0
    %v594 = vadd.f32 %v581, %v593
    %v595 = vpop.f32.mrf.mxu0
    %596 = vdwg.mxu0
    %v597 = vld [vmem:[%s4] sm:$0x3]
    %v599 = vperm.slane %v597, 0
    %v600 = vperm.slane %v597, 1
    %v603 = vadd.f32 %v568, %v599
    %v604 = vadd.f32 %v594, %v600
    %v605 = vtanh.pop %v603
    %v606 = vtanh.pop %v604
    %v607 = vpack.c.bf16 %v605, %v605
    %v608 = vpack.c.bf16 %v606, %v606
    %v609 = vld [vmem:[#allocation10] sm:$0xff]
    %v610 = vld [vmem:[#allocation10 + $0x8] sm:$0xff]
    %v611 = vld [vmem:[#allocation10 + $0x10] sm:$0xff]
    %v612 = vld [vmem:[#allocation10 + $0x18] sm:$0xff]
    %v613 = vld [vmem:[#allocation10 + $0x20] sm:$0xff]
    %v614 = vld [vmem:[#allocation10 + $0x28] sm:$0xff]
    %v615 = vld [vmem:[#allocation10 + $0x30] sm:$0xff]
    %v616 = vld [vmem:[#allocation10 + $0x38] sm:$0xff]
    %v617 = vld [vmem:[#allocation10 + $0x40] sm:$0xff]
    %v618 = vld [vmem:[#allocation10 + $0x48] sm:$0xff]
    %v619 = vld [vmem:[#allocation10 + $0x50] sm:$0xff]
    %v620 = vld [vmem:[#allocation10 + $0x58] sm:$0xff]
    %v621 = vld [vmem:[#allocation10 + $0x60] sm:$0xff]
    %v622 = vld [vmem:[#allocation10 + $0x68] sm:$0xff]
    %v623 = vld [vmem:[#allocation10 + $0x70] sm:$0xff]
    %v624 = vld [vmem:[#allocation10 + $0x78] sm:$0xff]
    %v625 = vld [vmem:[#allocation10 + $0x80] sm:$0xff]
    %v626 = vld [vmem:[#allocation10 + $0x88] sm:$0xff]
    %v627 = vld [vmem:[#allocation10 + $0x90] sm:$0xff]
    %v628 = vld [vmem:[#allocation10 + $0x98] sm:$0xff]
    %v629 = vld [vmem:[#allocation10 + $0xa0] sm:$0xff]
    %v630 = vld [vmem:[#allocation10 + $0xa8] sm:$0xff]
    %v631 = vld [vmem:[#allocation10 + $0xb0] sm:$0xff]
    %v632 = vld [vmem:[#allocation10 + $0xb8] sm:$0xff]
    %v633 = vld [vmem:[#allocation10 + $0xc0] sm:$0xff]
    %v634 = vld [vmem:[#allocation10 + $0xc8] sm:$0xff]
    %v635 = vld [vmem:[#allocation10 + $0xd0] sm:$0xff]
    %v636 = vld [vmem:[#allocation10 + $0xd8] sm:$0xff]
    %v637 = vld [vmem:[#allocation10 + $0xe0] sm:$0xff]
    %v638 = vld [vmem:[#allocation10 + $0xe8] sm:$0xff]
    %v639 = vld [vmem:[#allocation10 + $0xf0] sm:$0xff]
    %v640 = vld [vmem:[#allocation10 + $0xf8] sm:$0xff]
    %v641 = vld [vmem:[%s6] sm:$0x3]
    %v643 = vperm.slane %v641, 0
    %v644 = vperm.slane %v641, 1
    %v679 = vunpack.c.l.b16 %v609
    %v680 = vunpack.c.h.b16 %v609
    %v681 = vunpack.c.l.b16 %v610
    %v682 = vunpack.c.h.b16 %v610
    %v683 = vunpack.c.l.b16 %v611
    %v684 = vunpack.c.h.b16 %v611
    %v685 = vunpack.c.l.b16 %v612
    %v686 = vunpack.c.h.b16 %v612
    %v687 = vunpack.c.l.b16 %v613
    %v688 = vunpack.c.h.b16 %v613
    %v689 = vunpack.c.l.b16 %v614
    %v690 = vunpack.c.h.b16 %v614
    %v691 = vunpack.c.l.b16 %v615
    %v692 = vunpack.c.h.b16 %v615
    %v693 = vunpack.c.l.b16 %v616
    %v694 = vunpack.c.h.b16 %v616
    %v695 = vunpack.c.l.b16 %v617
    %v696 = vunpack.c.h.b16 %v617
    %v697 = vunpack.c.l.b16 %v618
    %v698 = vunpack.c.h.b16 %v618
    %v699 = vunpack.c.l.b16 %v619
    %v700 = vunpack.c.h.b16 %v619
    %v701 = vunpack.c.l.b16 %v620
    %v702 = vunpack.c.h.b16 %v620
    %v703 = vunpack.c.l.b16 %v621
    %v704 = vunpack.c.h.b16 %v621
    %v705 = vunpack.c.l.b16 %v622
    %v706 = vunpack.c.h.b16 %v622
    %v707 = vunpack.c.l.b16 %v623
    %v708 = vunpack.c.h.b16 %v623
    %v709 = vunpack.c.l.b16 %v624
    %v710 = vunpack.c.h.b16 %v624
    %v711 = vunpack.c.l.b16 %v625
    %v712 = vunpack.c.h.b16 %v625
    %v713 = vunpack.c.l.b16 %v626
    %v714 = vunpack.c.h.b16 %v626
    %v715 = vunpack.c.l.b16 %v627
    %v716 = vunpack.c.h.b16 %v627
    %v717 = vunpack.c.l.b16 %v628
    %v718 = vunpack.c.h.b16 %v628
    %v719 = vunpack.c.l.b16 %v629
    %v720 = vunpack.c.h.b16 %v629
    %v721 = vunpack.c.l.b16 %v630
    %v722 = vunpack.c.h.b16 %v630
    %v723 = vunpack.c.l.b16 %v631
    %v724 = vunpack.c.h.b16 %v631
    %v725 = vunpack.c.l.b16 %v632
    %v726 = vunpack.c.h.b16 %v632
    %v727 = vunpack.c.l.b16 %v633
    %v728 = vunpack.c.h.b16 %v633
    %v729 = vunpack.c.l.b16 %v634
    %v730 = vunpack.c.h.b16 %v634
    %v731 = vunpack.c.l.b16 %v635
    %v732 = vunpack.c.h.b16 %v635
    %v733 = vunpack.c.l.b16 %v636
    %v734 = vunpack.c.h.b16 %v636
    %v735 = vunpack.c.l.b16 %v637
    %v736 = vunpack.c.h.b16 %v637
    %v737 = vunpack.c.l.b16 %v638
    %v738 = vunpack.c.h.b16 %v638
    %v739 = vunpack.c.l.b16 %v639
    %v740 = vunpack.c.h.b16 %v639
    %v741 = vunpack.c.l.b16 %v640
    %v742 = vunpack.c.h.b16 %v640
    %v743 = vpack.c.b16 %v681, %v679
    %v744 = vpack.c.b16 %v682, %v680
    %v745 = vpack.c.b16 %v685, %v683
    %v746 = vpack.c.b16 %v686, %v684
    %v747 = vpack.c.b16 %v689, %v687
    %v748 = vpack.c.b16 %v690, %v688
    %v749 = vpack.c.b16 %v693, %v691
    %v750 = vpack.c.b16 %v694, %v692
    %v751 = vpack.c.b16 %v697, %v695
    %v752 = vpack.c.b16 %v698, %v696
    %v753 = vpack.c.b16 %v701, %v699
    %v754 = vpack.c.b16 %v702, %v700
    %v755 = vpack.c.b16 %v705, %v703
    %v756 = vpack.c.b16 %v706, %v704
    %v757 = vpack.c.b16 %v709, %v707
    %v758 = vpack.c.b16 %v710, %v708
    %v759 = vpack.c.b16 %v713, %v711
    %v760 = vpack.c.b16 %v714, %v712
    %v761 = vpack.c.b16 %v717, %v715
    %v762 = vpack.c.b16 %v718, %v716
    %v763 = vpack.c.b16 %v721, %v719
    %v764 = vpack.c.b16 %v722, %v720
    %v765 = vpack.c.b16 %v725, %v723
    %v766 = vpack.c.b16 %v726, %v724
    %v767 = vpack.c.b16 %v729, %v727
    %v768 = vpack.c.b16 %v730, %v728
    %v769 = vpack.c.b16 %v733, %v731
    %v770 = vpack.c.b16 %v734, %v732
    %v771 = vpack.c.b16 %v737, %v735
    %v772 = vpack.c.b16 %v738, %v736
    %v773 = vpack.c.b16 %v741, %v739
    %v774 = vpack.c.b16 %v742, %v740
    %807 = vmatpush.bf16.msra.mxu0 %v757
    %808 = vmatpush.bf16.msra.mxu0 %v755
    %809 = vmatpush.bf16.msra.mxu0 %v753
    %810 = vmatpush.bf16.msra.mxu0 %v751
    %811 = vmatpush.bf16.msra.mxu0 %v749
    %812 = vmatpush.bf16.msra.mxu0 %v747
    %813 = vmatpush.bf16.msra.mxu0 %v745
    %814 = vmatpush.bf16.msra.mxu0 %v743
    %815 = vmatmul.bf16.gmra.mxu0 %v607
    %v816 = vpop.f32.mrf.mxu0
    %v817 = vadd.f32 %v643, %v816
    %v818 = vpop.f32.mrf.mxu0
    %819 = vdwg.mxu0
    %820 = vmatpush.bf16.msra.mxu0 %v773
    %821 = vmatpush.bf16.msra.mxu0 %v771
    %822 = vmatpush.bf16.msra.mxu0 %v769
    %823 = vmatpush.bf16.msra.mxu0 %v767
    %824 = vmatpush.bf16.msra.mxu0 %v765
    %825 = vmatpush.bf16.msra.mxu0 %v763
    %826 = vmatpush.bf16.msra.mxu0 %v761
    %827 = vmatpush.bf16.msra.mxu0 %v759
    %828 = vmatmul.bf16.gmra.mxu0 %v608
    %v829 = vpop.f32.mrf.mxu0
    %v830 = vadd.f32 %v817, %v829
    %v831 = vpop.f32.mrf.mxu0
    %832 = vdwg.mxu0
    %833 = vmatpush.bf16.msra.mxu0 %v758
    %834 = vmatpush.bf16.msra.mxu0 %v756
    %835 = vmatpush.bf16.msra.mxu0 %v754
    %836 = vmatpush.bf16.msra.mxu0 %v752
    %837 = vmatpush.bf16.msra.mxu0 %v750
    %838 = vmatpush.bf16.msra.mxu0 %v748
    %839 = vmatpush.bf16.msra.mxu0 %v746
    %840 = vmatpush.bf16.msra.mxu0 %v744
    %841 = vmatmul.bf16.gmra.mxu0 %v607
    %v842 = vpop.f32.mrf.mxu0
    %v843 = vadd.f32 %v644, %v842
    %v844 = vpop.f32.mrf.mxu0
    %845 = vdwg.mxu0
    %846 = vmatpush.bf16.msra.mxu0 %v774
    %847 = vmatpush.bf16.msra.mxu0 %v772
    %848 = vmatpush.bf16.msra.mxu0 %v770
    %849 = vmatpush.bf16.msra.mxu0 %v768
    %850 = vmatpush.bf16.msra.mxu0 %v766
    %851 = vmatpush.bf16.msra.mxu0 %v764
    %852 = vmatpush.bf16.msra.mxu0 %v762
    %853 = vmatpush.bf16.msra.mxu0 %v760
    %854 = vmatmul.bf16.gmra.mxu0 %v608
    %v855 = vpop.f32.mrf.mxu0
    %v856 = vadd.f32 %v843, %v855
    %v857 = vpop.f32.mrf.mxu0
    %858 = vdwg.mxu0
    %859 = vst [vmem:[#allocation11] sm:$0xff] %v830
    %860 = vst [vmem:[#allocation11 + $0x8] sm:$0xff] %v856
    // Predicated region
    $region50: #{tpu_custom_call.1} parent=1 // pred_check
      _
    $region51: #{tpu_custom_call.1} parent=1 // pred_check_branch
      %862 = sbr.rel (0) target = $region53
    $region52: #{tpu_custom_call.1} parent=1 // pred_region
      %864 = vsyncadd [#allocation4], 0
      %s866 = sshll.u32 [#allocation11], 4
      %s867 = int_to_ptr.vmem [resolvable:$true] %s866
      %s868 = sshll.u32 %s7, 4
      %s869 = int_to_ptr.hbm [resolvable:$true] %s868
      %871 = dma.vmem_to_hbm [thread:$0]  %s867, 256, %s869, [#allocation4]
    $region53: #{tpu_custom_call.1} parent=1 // pred_fallthru
      _
    // Predicated region
    $region54: #{tpu_custom_call.1} parent=1 // pred_check
      _
    $region55: #{tpu_custom_call.1} parent=1 // pred_check_branch
      %873 = sbr.rel (0) target = $region57
    $region56: #{tpu_custom_call.1} parent=1 // pred_region
      %875 = dma.done [#allocation4], 256
    $region57: #{tpu_custom_call.1} parent=1 // pred_fallthru
      _
    %876 = vsyncpa [#allocation3], 1
    %877 = vsyncpa [#allocation6], 1
    %878 = vsyncpa [#allocation9], 1
    %879 = vsyncpa [#allocation4], 1

</llo_original>
